<compile_context>
chip_gen: v7x
topology: tpu7x:2x2x1
jax: 0.10.0
libtpu: 0.0.40
codegen_flags: <defaults>
</compile_context>

<pallas_src>
import jax
import jax.numpy as jnp
from jax.experimental import pallas as pl
from jax.experimental.pallas import tpu as pltpu


def _self_attention_heads_kernel(m_ref, w_ref, pool_ref, alpha_ref):
    # m_ref:     (N, B, S, D) VMEM (native dtype)
    # w_ref:     (N, 1, 1, D) VMEM (each head's nn.Linear(input_dim, 1).weight)
    # pool_ref:  (N, B, D)    f32 out
    # alpha_ref: (N, B, S, 1) f32 out  (wrapper reshapes to (N, B, 1, S) == permute(0,2,1))
    M = m_ref[...].astype(jnp.float32)          # cast in-vreg; DMA stays native-width
    w = w_ref[...].astype(jnp.float32)          # (N, 1, 1, D) broadcasts over (N, B, S, D)

    # scale[n,b,s,0] = <M[n,b,s,:], w[n]>  -- VPU broadcast-mul + XLU lane reduce.
    # (Linear bias dropped: it is constant over the batch axis, so softmax(dim=0) cancels it.)
    # keepdims keeps S on sublanes / the size-1 dim on lanes: no relayout before pooling.
    scale = jnp.sum(M * w, axis=-1, keepdims=True)          # (N, B, S, 1)

    # F.softmax(scale, dim=0): softmax over the *batch* axis, per head / sequence position.
    m_max = jnp.max(scale, axis=1, keepdims=True)
    e = jnp.exp(scale - m_max)
    alpha = e / jnp.sum(e, axis=1, keepdims=True)           # (N, B, S, 1)

    # attn_pool[n,b,:] = sum_s alpha[n,b,s] * M[n,b,s,:]  (== bmm(alpha, M)[:, 0, :])
    # Lane-broadcast of alpha over D (free) + XLU sublane reduce over S; MXU stays idle.
    pool = jnp.sum(alpha * M, axis=2)                       # (N, B, D)

    pool_ref[...] = pool.astype(pool_ref.dtype)
    alpha_ref[...] = alpha.astype(alpha_ref.dtype)


def self_attention_general_heads(M, weight, bias=None):
    """Batched over N independent SelfAttention('general') heads in ONE pallas_call step.

    M:      (N, B, S, D)   activations (f32 or bf16)
    weight: (N, 1, D)      each head's nn.Linear(input_dim, 1).weight
    bias:   (N,) or None   each head's nn.Linear bias -- accepted for interface parity but
                           unused: softmax over the batch axis is shift-invariant, so a
                           per-head scalar bias cancels exactly in alpha and attn_pool.
    Returns (attn_pool (N, B, D) f32, alpha (N, B, 1, S) f32).
    """
    del bias  # cancels under softmax(dim=0) shift invariance
    N, B, S, D = M.shape
    w = weight.reshape(N, 1, 1, D)

    pool, alpha = pl.pallas_call(
        _self_attention_heads_kernel,
        in_specs=[
            pl.BlockSpec(memory_space=pltpu.MemorySpace.VMEM),   # M  (whole array, 1 step)
            pl.BlockSpec(memory_space=pltpu.MemorySpace.VMEM),   # weight
        ],
        out_specs=(
            pl.BlockSpec(memory_space=pltpu.MemorySpace.VMEM),   # attn_pool
            pl.BlockSpec(memory_space=pltpu.MemorySpace.VMEM),   # alpha
        ),
        out_shape=(
            jax.ShapeDtypeStruct((N, B, D), jnp.float32),
            jax.ShapeDtypeStruct((N, B, S, 1), jnp.float32),
        ),
    )(M, w)

    # permute(0, 2, 1) of each head's (B, S, 1) softmax result -> (B, 1, S).
    # (N, B, S, 1) and (N, B, 1, S) share the same row-major data order: pure reshape.
    return pool, alpha.reshape(N, B, 1, S)


def self_attention_general(M, weight, bias=None):
    """Single-module path, matching PyTorch SelfAttention(att_type='general').forward.

    M: (B, S, D); weight: (1, D); bias: (1,) or None.
    Returns (attn_pool (B, D), alpha (B, 1, S)).
    """
    # TODO(synk): att_type='general2' branch not implemented (module default is 'general').
    pool, alpha = self_attention_general_heads(M[None], weight[None], None)
    return pool[0], alpha[0]


def _reference_one_head(M, weight, bias):
    # Pure-JAX reference WITH the bias, mirroring the PyTorch forward exactly.
    scale = jnp.einsum('bsd,od->bso', M, weight) + bias                  # (B, S, 1)
    alpha = jax.nn.softmax(scale, axis=0)                                # softmax over batch
    alpha = jnp.transpose(alpha, (0, 2, 1))                              # (B, 1, S)
    pool = jnp.einsum('bos,bsd->bod', alpha, M)[:, 0, :]                 # (B, D)
    return pool, alpha


if __name__ == "__main__":
    key = jax.random.PRNGKey(0)
    # N heads (per-modality / per-speaker SelfAttention instances in BiDDIN),
    # batch, seq_len, input_dim.
    N, B, S, D = 3, 2, 8, 32

    k_m, k_w, k_b = jax.random.split(key, 3)
    M = jax.random.normal(k_m, (N, B, S, D), dtype=jnp.float32)

    # Deterministic nn.Linear(input_dim, 1) init: uniform(-1/sqrt(D), 1/sqrt(D)).
    bound = 1.0 / (D ** 0.5)
    W = jax.random.uniform(k_w, (N, 1, D), dtype=jnp.float32, minval=-bound, maxval=bound)
    b = jax.random.uniform(k_b, (N,), dtype=jnp.float32, minval=-bound, maxval=bound)

    # Batched: all heads in one grid-less pallas_call.
    pool, alpha = self_attention_general_heads(M, W, b)
    pool = jax.block_until_ready(pool)
    alpha = jax.block_until_ready(alpha)

    ref_pool, ref_alpha = jax.vmap(_reference_one_head)(M, W, b)
    assert pool.shape == (N, B, D) and alpha.shape == (N, B, 1, S)
    assert jnp.allclose(pool, ref_pool, atol=1e-5, rtol=1e-5)
    assert jnp.allclose(alpha, ref_alpha, atol=1e-5, rtol=1e-5)

    # Single-module path (exact PyTorch forward signature semantics).
    pool1, alpha1 = self_attention_general(M[0], W[0], b[0:1])
    pool1 = jax.block_until_ready(pool1)
    alpha1 = jax.block_until_ready(alpha1)
    assert pool1.shape == (B, D) and alpha1.shape == (B, 1, S)
    assert jnp.allclose(pool1, ref_pool[0], atol=1e-5, rtol=1e-5)
    assert jnp.allclose(alpha1, ref_alpha[0], atol=1e-5, rtol=1e-5)

    print("KERNEL_OK")
</pallas_src>

<mosaic_0001>
module attributes {stable_mosaic.version = 11 : i64} {
  func.func @_self_attention_heads_kernel(%arg0: memref<3x2x8x32xf32, #tpu.memory_space<vmem>>, %arg1: memref<3x1x1x32xf32, #tpu.memory_space<vmem>>, %arg2: memref<3x2x32xf32, #tpu.memory_space<vmem>>, %arg3: memref<3x2x8x1xf32, #tpu.memory_space<vmem>>) attributes {dimension_semantics = [], scalar_prefetch = 0 : i64, scratch_operands = 0 : i64, tpu.core_type = #tpu.core_type<tc>} {
    %c0 = arith.constant 0 : index
    %c0_0 = arith.constant 0 : index
    %c0_1 = arith.constant 0 : index
    %c0_2 = arith.constant 0 : index
    %0 = vector.load %arg0[%c0, %c0_0, %c0_1, %c0_2] : memref<3x2x8x32xf32, #tpu.memory_space<vmem>>, vector<3x2x8x32xf32>
    %c0_3 = arith.constant 0 : index
    %c0_4 = arith.constant 0 : index
    %c0_5 = arith.constant 0 : index
    %c0_6 = arith.constant 0 : index
    %1 = vector.load %arg1[%c0_3, %c0_4, %c0_5, %c0_6] : memref<3x1x1x32xf32, #tpu.memory_space<vmem>>, vector<3x1x1x32xf32>
    %2 = vector.broadcast %1 : vector<3x1x1x32xf32> to vector<3x2x8x32xf32>
    %3 = arith.mulf %0, %2 : vector<3x2x8x32xf32>
    %cst = arith.constant dense<0.000000e+00> : vector<3x2x8xf32>
    %4 = vector.multi_reduction <add>, %3, %cst [3] : vector<3x2x8x32xf32> to vector<3x2x8xf32>
    %5 = vector.shape_cast %4 : vector<3x2x8xf32> to vector<3x2x8x1xf32>
    %cst_7 = arith.constant dense<0xFF800000> : vector<3x8x1xf32>
    %6 = vector.multi_reduction <maximumf>, %5, %cst_7 [1] : vector<3x2x8x1xf32> to vector<3x8x1xf32>
    %7 = vector.shape_cast %6 : vector<3x8x1xf32> to vector<3x1x8x1xf32>
    %8 = vector.broadcast %7 : vector<3x1x8x1xf32> to vector<3x2x8x1xf32>
    %9 = arith.subf %5, %8 : vector<3x2x8x1xf32>
    %10 = math.exp %9 : vector<3x2x8x1xf32>
    %cst_8 = arith.constant dense<0.000000e+00> : vector<3x8x1xf32>
    %11 = vector.multi_reduction <add>, %10, %cst_8 [1] : vector<3x2x8x1xf32> to vector<3x8x1xf32>
    %12 = vector.shape_cast %11 : vector<3x8x1xf32> to vector<3x1x8x1xf32>
    %13 = vector.broadcast %12 : vector<3x1x8x1xf32> to vector<3x2x8x1xf32>
    %14 = arith.divf %10, %13 : vector<3x2x8x1xf32>
    %15 = vector.broadcast %14 : vector<3x2x8x1xf32> to vector<3x2x8x32xf32>
    %16 = arith.mulf %15, %0 : vector<3x2x8x32xf32>
    %cst_9 = arith.constant dense<0.000000e+00> : vector<3x2x32xf32>
    %17 = vector.multi_reduction <add>, %16, %cst_9 [2] : vector<3x2x8x32xf32> to vector<3x2x32xf32>
    %c0_10 = arith.constant 0 : index
    %c0_11 = arith.constant 0 : index
    %c0_12 = arith.constant 0 : index
    %18 = vector.load %arg2[%c0_10, %c0_11, %c0_12] : memref<3x2x32xf32, #tpu.memory_space<vmem>>, vector<3x2x32xf32>
    tpu.vector_store %arg2[%c0_10, %c0_11, %c0_12], %17 {strides = array<i32>} : memref<3x2x32xf32, #tpu.memory_space<vmem>>, vector<3x2x32xf32>,
    %c0_13 = arith.constant 0 : index
    %c0_14 = arith.constant 0 : index
    %c0_15 = arith.constant 0 : index
    %c0_16 = arith.constant 0 : index
    %19 = vector.load %arg3[%c0_13, %c0_14, %c0_15, %c0_16] : memref<3x2x8x1xf32, #tpu.memory_space<vmem>>, vector<3x2x8x1xf32>
    tpu.vector_store %arg3[%c0_13, %c0_14, %c0_15, %c0_16], %14 {strides = array<i32>} : memref<3x2x8x1xf32, #tpu.memory_space<vmem>>, vector<3x2x8x1xf32>,
    return
  }
}

</mosaic_0001>

<llo_original>
// kernel: tpu_custom_call.1
$region0: #{tpu_custom_call.1}
  #allocation0 [shape = 'u32[]', space=smem, size = 0x4, offset = 0x4, fixed_abs, tag = 'smem constant byte address 0x4 - core index']
  #allocation1 [shape = 'u32[144,128]{1,0:T(1,128)}', space=vmem, size = 0x12000, scoped, tag = 'internal scratch']
  %s0 = inlined_call_operand.hbm [shape: f32[3,2,8,32], index: 0, kind: input, shape index: {}]
  %s1 = inlined_call_operand.vmem [shape: f32[3,1,1,32], index: 1, kind: input, shape index: {}]
  %s2 = inlined_call_operand.hbm [shape: f32[3,2,32], index: 2, kind: output, shape index: {0}]
  %s3 = inlined_call_operand.vmem [shape: f32[3,2,8,1], index: 3, kind: output, shape index: {1}]
  %4 = xla_tuple %s2, %s3
  %s5 = sld [smem:[#allocation0]]
  $region30: #{tpu_custom_call.1} parent=0
    _
  %s7 = ssub.s32 1, %s5
  %s8 = scalar_select 0, %s7, %s5
  $region1: #{tpu_custom_call.1} parent=0
    #allocation2 [shape = 'u8[24576]{0}', space=vmem, size = 0x6000, scoped, tag = 'input window, operand 0, single buffered']
    #allocation3 [shape = 's32[1]{0}', space=sflag, size = 0x4, scoped, tag = 'scoped memory for tpu_custom_call.1']
    #allocation4 [shape = 's32[1]{0}', space=sflag, size = 0x4, scoped, tag = 'scoped memory for tpu_custom_call.1']
    #allocation5 [shape = 'u8[3072]{0}', space=vmem, size = 0xc00, scoped, tag = 'output window, operand 0, single buffered']
    %9 = vsyncpa [#allocation3], 0
    %10 = vsyncpa [#allocation4], 0
    // Predicated region
    $region2: #{tpu_custom_call.1} parent=1 // pred_check
      _
    $region3: #{tpu_custom_call.1} parent=1 // pred_check_branch
      %12 = sbr.rel (0) target = $region5
    $region4: #{tpu_custom_call.1} parent=1 // pred_region
      %s14 = ssub.s32 768, 768
      %15 = vsyncadd [#allocation3], %s14
      %s16 = sshll.u32 [#allocation2], 4
      %s17 = int_to_ptr.vmem [resolvable:$true] %s16
      %22 = dma.hbm_to_vmem [thread:$0]  %s0, 768, %s17, [#allocation3], 128, 128, 8
    $region5: #{tpu_custom_call.1} parent=1 // pred_fallthru
      _
    // Predicated region
    $region6: #{tpu_custom_call.1} parent=1 // pred_check
      _
    $region7: #{tpu_custom_call.1} parent=1 // pred_check_branch
      %24 = sbr.rel (0) target = $region9
    $region8: #{tpu_custom_call.1} parent=1 // pred_region
      _
    $region9: #{tpu_custom_call.1} parent=1 // pred_fallthru
      _
    // Predicated region
    $region10: #{tpu_custom_call.1} parent=1 // pred_check
      _
    $region11: #{tpu_custom_call.1} parent=1 // pred_check_branch
      %26 = sbr.rel (0) target = $region13
    $region12: #{tpu_custom_call.1} parent=1 // pred_region
      %27 = dma.done [#allocation3], 768
    $region13: #{tpu_custom_call.1} parent=1 // pred_fallthru
      _
    %v28 = vld [vmem:[#allocation2] sm:$0xff]
    %v29 = vld [vmem:[#allocation2 + $0x8] sm:$0xff]
    %v30 = vld [vmem:[#allocation2 + $0x10] sm:$0xff]
    %v31 = vld [vmem:[#allocation2 + $0x18] sm:$0xff]
    %v32 = vld [vmem:[#allocation2 + $0x20] sm:$0xff]
    %v33 = vld [vmem:[#allocation2 + $0x28] sm:$0xff]
    %v34 = vld [vmem:[%s1] sm:$0x1]
    %v35 = vld [vmem:[%s1 + $0x1] sm:$0x1]
    %v36 = vld [vmem:[%s1 + $0x2] sm:$0x1]
    %v40 = vlaneseq
    %v41 = vshrl.u32 %v40, 7
    %v42 = vsub.s32 0, %v41
    %v43 = vrot.slane %v34, %v42
    %v44 = vlaneseq
    %v45 = vshrl.u32 %v44, 7
    %v46 = vsub.s32 0, %v45
    %v47 = vrot.slane %v35, %v46
    %v48 = vlaneseq
    %v49 = vshrl.u32 %v48, 7
    %v50 = vsub.s32 0, %v49
    %v51 = vrot.slane %v36, %v50
    %v55 = vmul.f32 %v28, %v43
    %v56 = vmul.f32 %v29, %v43
    %v57 = vmul.f32 %v30, %v47
    %v58 = vmul.f32 %v31, %v47
    %v59 = vmul.f32 %v32, %v51
    %v60 = vmul.f32 %v33, %v51
    %vm61 = vcmask 261120
    %v62 = vsel %vm61, %v55, 0.0
    %63 = vadd.xlane.f32.xlu0 %v62
    %v64 = vpop.xlane.xlu0 %63
    %v65 = vsel %vm61, %v56, 0.0
    %66 = vadd.xlane.f32.xlu0 %v65
    %v67 = vpop.xlane.xlu0 %66
    %v68 = vsel %vm61, %v57, 0.0
    %69 = vadd.xlane.f32.xlu0 %v68
    %v70 = vpop.xlane.xlu0 %69
    %v71 = vsel %vm61, %v58, 0.0
    %72 = vadd.xlane.f32.xlu0 %v71
    %v73 = vpop.xlane.xlu0 %72
    %v74 = vsel %vm61, %v59, 0.0
    %75 = vadd.xlane.f32.xlu0 %v74
    %v76 = vpop.xlane.xlu0 %75
    %v77 = vsel %vm61, %v60, 0.0
    %78 = vadd.xlane.f32.xlu0 %v77
    %v79 = vpop.xlane.xlu0 %78
    %v80 = vmax.f32 %v64, %v67
    %v81 = vmax.f32 %v70, %v73
    %v82 = vmax.f32 %v76, %v79
    %v83 = vsub.f32 %v64, %v80
    %v84 = vsub.f32 %v67, %v80
    %v85 = vsub.f32 %v70, %v81
    %v86 = vsub.f32 %v73, %v81
    %v87 = vsub.f32 %v76, %v82
    %v88 = vsub.f32 %v79, %v82
    %v89 = vmul.f32 %v83, 1.442695
    %v90 = vpow.pop %v89
    %v91 = vmul.f32 %v84, 1.442695
    %v92 = vpow.pop %v91
    %v93 = vmul.f32 %v85, 1.442695
    %v94 = vpow.pop %v93
    %v95 = vmul.f32 %v86, 1.442695
    %v96 = vpow.pop %v95
    %v97 = vmul.f32 %v87, 1.442695
    %v98 = vpow.pop %v97
    %v99 = vmul.f32 %v88, 1.442695
    %v100 = vpow.pop %v99
    %v101 = vadd.f32 %v90, %v92
    %v102 = vadd.f32 %v94, %v96
    %v103 = vadd.f32 %v98, %v100
    %v104 = vrcp.pop %v101
    %v105 = vmul.f32 %v90, %v104
    %v106 = vmul.f32 %v92, %v104
    %v107 = vrcp.pop %v102
    %v108 = vmul.f32 %v94, %v107
    %v109 = vmul.f32 %v96, %v107
    %v110 = vrcp.pop %v103
    %v111 = vmul.f32 %v98, %v110
    %v112 = vmul.f32 %v100, %v110
    %v113 = vmul.f32 %v105, %v28
    %v114 = vmul.f32 %v106, %v29
    %v115 = vmul.f32 %v108, %v30
    %v116 = vmul.f32 %v109, %v31
    %v117 = vmul.f32 %v111, %v32
    %v118 = vmul.f32 %v112, %v33
    %v119 = vsel %vm61, %v113, 0.0
    %v120 = vrot.slane %v119, 4
    %v121 = vadd.f32 %v119, %v120
    %v122 = vrot.slane %v121, 2
    %v123 = vadd.f32 %v121, %v122
    %v124 = vrot.slane %v123, 1
    %v125 = vadd.f32 %v123, %v124
    %v126 = vsel %vm61, %v114, 0.0
    %v127 = vrot.slane %v126, 4
    %v128 = vadd.f32 %v126, %v127
    %v129 = vrot.slane %v128, 2
    %v130 = vadd.f32 %v128, %v129
    %v131 = vrot.slane %v130, 1
    %v132 = vadd.f32 %v130, %v131
    %v133 = vsel %vm61, %v115, 0.0
    %v134 = vrot.slane %v133, 4
    %v135 = vadd.f32 %v133, %v134
    %v136 = vrot.slane %v135, 2
    %v137 = vadd.f32 %v135, %v136
    %v138 = vrot.slane %v137, 1
    %v139 = vadd.f32 %v137, %v138
    %v140 = vsel %vm61, %v116, 0.0
    %v141 = vrot.slane %v140, 4
    %v142 = vadd.f32 %v140, %v141
    %v143 = vrot.slane %v142, 2
    %v144 = vadd.f32 %v142, %v143
    %v145 = vrot.slane %v144, 1
    %v146 = vadd.f32 %v144, %v145
    %v147 = vsel %vm61, %v117, 0.0
    %v148 = vrot.slane %v147, 4
    %v149 = vadd.f32 %v147, %v148
    %v150 = vrot.slane %v149, 2
    %v151 = vadd.f32 %v149, %v150
    %v152 = vrot.slane %v151, 1
    %v153 = vadd.f32 %v151, %v152
    %v154 = vsel %vm61, %v118, 0.0
    %v155 = vrot.slane %v154, 4
    %v156 = vadd.f32 %v154, %v155
    %v157 = vrot.slane %v156, 2
    %v158 = vadd.f32 %v156, %v157
    %v159 = vrot.slane %v158, 1
    %v160 = vadd.f32 %v158, %v159
    %vm167 = vcmask 1041409
    %v168 = vsel %vm167, %v132, %v125
    %v169 = vsel %vm167, %v146, %v139
    %v170 = vsel %vm167, %v160, %v153
    %vm174 = vcmask 254976
    %175 = vst.msk [vmem:[#allocation5] sm:$0x3] %vm174, %v168
    %176 = vst.msk [vmem:[#allocation5 + $0x2] sm:$0x3] %vm174, %v169
    %177 = vst.msk [vmem:[#allocation5 + $0x4] sm:$0x3] %vm174, %v170
    %vm178 = vcmask 7168
    %179 = vst.msk [vmem:[%s3] sm:$0xff] %vm178, %v105
    %180 = vst.msk [vmem:[%s3 + $0x8] sm:$0xff] %vm178, %v106
    %181 = vst.msk [vmem:[%s3 + $0x10] sm:$0xff] %vm178, %v108
    %182 = vst.msk [vmem:[%s3 + $0x18] sm:$0xff] %vm178, %v109
    %183 = vst.msk [vmem:[%s3 + $0x20] sm:$0xff] %vm178, %v111
    %184 = vst.msk [vmem:[%s3 + $0x28] sm:$0xff] %vm178, %v112
    // Predicated region
    $region14: #{tpu_custom_call.1} parent=1 // pred_check
      _
    $region15: #{tpu_custom_call.1} parent=1 // pred_check_branch
      %186 = sbr.rel (0) target = $region17
    $region16: #{tpu_custom_call.1} parent=1 // pred_region
      %s188 = ssub.s32 96, 96
      %189 = vsyncadd [#allocation4], %s188
      %s190 = sshll.u32 [#allocation5], 4
      %s191 = int_to_ptr.vmem [resolvable:$true] %s190
      %196 = dma.vmem_to_hbm [thread:$0]  %s191, 96, %s2, [#allocation4], 32, 32, 2
    $region17: #{tpu_custom_call.1} parent=1 // pred_fallthru
      _
    // Predicated region
    $region18: #{tpu_custom_call.1} parent=1 // pred_check
      _
    $region19: #{tpu_custom_call.1} parent=1 // pred_check_branch
      %198 = sbr.rel (0) target = $region21
    $region20: #{tpu_custom_call.1} parent=1 // pred_region
      _
    $region21: #{tpu_custom_call.1} parent=1 // pred_fallthru
      _
    // Predicated region
    $region22: #{tpu_custom_call.1} parent=1 // pred_check
      _
    $region23: #{tpu_custom_call.1} parent=1 // pred_check_branch
      %200 = sbr.rel (0) target = $region25
    $region24: #{tpu_custom_call.1} parent=1 // pred_region
      %201 = dma.done [#allocation4], 96
    $region25: #{tpu_custom_call.1} parent=1 // pred_fallthru
      _
    // Predicated region
    $region26: #{tpu_custom_call.1} parent=1 // pred_check
      _
    $region27: #{tpu_custom_call.1} parent=1 // pred_check_branch
      %203 = sbr.rel (0) target = $region29
    $region28: #{tpu_custom_call.1} parent=1 // pred_region
      _
    $region29: #{tpu_custom_call.1} parent=1 // pred_fallthru
      _
    %204 = vsyncpa [#allocation3], 1
    %205 = vsyncpa [#allocation4], 1

</llo_original>
